<compile_context>
chip_gen: v7x
topology: tpu7x:2x2x1
jax: 0.10.0
libtpu: 0.0.40
codegen_flags: <defaults>
</compile_context>

<pallas_src>
import jax
import jax.numpy as jnp
from jax.experimental import pallas as pl
from jax.experimental.pallas import tpu as pltpu


def _skipgram_kernel(u_ref, v_ref, vn_ref, rep_ref, sel_ref, pos_ref, neg_ref):
    u = u_ref[...]        # (TB, D)
    v = v_ref[...]        # (TB, D)
    vn = vn_ref[...]      # (TB, K*D)  -- negatives, flattened lane-dense

    # pos[t] = sum_d u[t, d] * v[t, d]; only TB/8 vregs, so a plain lane
    # reduce (f32 accumulation) is negligible and keeps lowering simple.
    pos = jnp.sum((u * v).astype(jnp.float32), axis=1, keepdims=True)  # (TB, 1)
    pos_ref[...] = pos.astype(pos_ref.dtype)

    # neg[t, k] = sum_d u[t, d] * vn[t, k*D + d]:
    #   1) replicate u across the K negative blocks via one MXU matmul against
    #      the constant 0/1 replication matrix (exact copy; XLU stays idle),
    #   2) dense (TB, K*D) elementwise product on the VPU,
    #   3) per-block D-reduction as one MXU matmul against the block-diagonal
    #      selection matrix, accumulating in f32.
    u_rep = jnp.dot(u, rep_ref[...])                                   # (TB, K*D)
    prod = u_rep * vn                                                  # (TB, K*D)
    neg = jnp.dot(prod, sel_ref[...], preferred_element_type=jnp.float32)
    neg_ref[...] = neg.astype(neg_ref.dtype)


def _pick_batch_tile(B, row_bytes):
    """Largest sensible batch tile: multiple of 128, VMEM-safe, >= ~8 steps."""
    # Keep the double-buffered input working set around <= 20 MiB.
    by_vmem = (10 * 1024 * 1024) // max(row_bytes, 1)
    # Aim for >= 8 grid steps so v7x's two TensorCores each get >= 4 pipelined
    # steps; cap at 4096 rows (diminishing returns past the step overhead).
    by_steps = B // 8
    tile = min(4096, by_vmem, max(by_steps, 128))
    tile = max(128, (tile // 128) * 128)
    return tile


def skipgram_forward(emb_u, emb_v, emb_v_neg, *, tile_b=None):
    """Pallas SkipGram forward.  Returns (pos (B,), neg (B, K))."""
    B, W, D = emb_u.shape
    Bn, K, Dn = emb_v_neg.shape
    assert emb_v.shape == (B, W, D)
    assert B == Bn and D == Dn
    # The PyTorch broadcast emb_u * emb_v_neg is only well-defined for a
    # single-word context window.
    assert W == 1, "SkipGram kernel expects a single target word (W == 1)."
    # TODO(synk): support W == K (per-negative context words) if ever needed.

    out_dtype = emb_u.dtype

    # Tiny problems: fixed pallas_call overhead dwarfs a few KB of HBM
    # traffic; let XLA fuse the two reductions instead (f32 accumulation).
    if B < 128:
        pos = jnp.sum((emb_u * emb_v).astype(jnp.float32), axis=(1, 2))
        neg = jnp.sum((emb_u * emb_v_neg).astype(jnp.float32), axis=2)
        return pos.astype(out_dtype), neg.astype(out_dtype)

    # Squeeze the size-1 window dim; flatten negatives to lane-dense (B, K*D).
    # Both reshapes are contiguous, i.e. free in XLA.
    u2 = emb_u.reshape(B, D)
    v2 = emb_v.reshape(B, D)
    vn_flat = emb_v_neg.reshape(B, K * D)

    itemsize = jnp.dtype(emb_u.dtype).itemsize
    row_bytes = (2 * D + K * D) * itemsize
    if tile_b is None:
        tile_b = _pick_batch_tile(B, row_bytes)
    else:
        assert tile_b % 128 == 0 or tile_b == B, (
            "tile_b must be a multiple of 128 (or equal to B) so the "
            "(tile_b, *) blocks satisfy the (8, 128) BlockSpec constraint.")
    grid = (pl.cdiv(B, tile_b),)

    # Constant 0/1 matrices (kept resident in VMEM by the constant index_map):
    #   rep_mat[d, k*D + d'] = (d == d')   -> u @ rep_mat replicates u K times
    #   sel_mat[k*D + d, k'] = (k == k')   -> per-block sum over D on the MXU
    cdt = emb_u.dtype
    rep_mat = jnp.tile(jnp.eye(D, dtype=cdt), (1, K))        # (D, K*D)
    sel_mat = jnp.repeat(jnp.eye(K, dtype=cdt), D, axis=0)   # (K*D, K)

    pos2, neg = pl.pallas_call(
        _skipgram_kernel,
        out_shape=(
            jax.ShapeDtypeStruct((B, 1), out_dtype),
            jax.ShapeDtypeStruct((B, K), out_dtype),
        ),
        grid=grid,
        in_specs=[
            pl.BlockSpec((tile_b, D), lambda i: (i, 0)),
            pl.BlockSpec((tile_b, D), lambda i: (i, 0)),
            pl.BlockSpec((tile_b, K * D), lambda i: (i, 0)),
            pl.BlockSpec((D, K * D), lambda i: (0, 0)),     # resident constant
            pl.BlockSpec((K * D, K), lambda i: (0, 0)),     # resident constant
        ],
        out_specs=(
            pl.BlockSpec((tile_b, 1), lambda i: (i, 0)),
            pl.BlockSpec((tile_b, K), lambda i: (i, 0)),
        ),
        compiler_params=pltpu.CompilerParams(
            dimension_semantics=("parallel",),
            vmem_limit_bytes=32 * 1024 * 1024,
        ),
    )(u2, v2, vn_flat, rep_mat, sel_mat)

    # Back to the PyTorch layout: pos (B,), neg (B, K).
    return pos2.reshape(B), neg


if __name__ == "__main__":
    # batch=1024, single target word, 8 negatives, embedding dim 32.
    # Default tile picker chooses tile_b=128 -> 8 grid steps (pipelined, and
    # >= 4 steps per TensorCore on v7x).  SkipGram.__init__ has no parameters.
    B, K, D = 1024, 8, 32
    key = jax.random.PRNGKey(0)
    ku, kv, kn = jax.random.split(key, 3)
    emb_u = jax.random.normal(ku, (B, 1, D), dtype=jnp.float32)
    emb_v = jax.random.normal(kv, (B, 1, D), dtype=jnp.float32)
    emb_v_neg = jax.random.normal(kn, (B, K, D), dtype=jnp.float32)

    pos, neg = skipgram_forward(emb_u, emb_v, emb_v_neg)
    jax.block_until_ready((pos, neg))

    # Reference check against plain JAX (same semantics as the PyTorch module).
    pos_ref = jnp.sum(emb_u * emb_v, axis=(1, 2))
    neg_ref = jnp.sum(emb_u * emb_v_neg, axis=2)
    assert pos.shape == (B,) and neg.shape == (B, K)
    assert jnp.allclose(pos, pos_ref, atol=1e-4, rtol=1e-4), float(
        jnp.max(jnp.abs(pos - pos_ref)))
    assert jnp.allclose(neg, neg_ref, atol=1e-4, rtol=1e-4), float(
        jnp.max(jnp.abs(neg - neg_ref)))

    print("KERNEL_OK")
</pallas_src>

<mosaic_0001>
module attributes {stable_mosaic.version = 11 : i64} {
  func.func @_skipgram_kernel(%arg0: i32, %arg1: memref<128x32xf32, #tpu.memory_space<vmem>>, %arg2: memref<128x32xf32, #tpu.memory_space<vmem>>, %arg3: memref<128x256xf32, #tpu.memory_space<vmem>>, %arg4: memref<32x256xf32, #tpu.memory_space<vmem>>, %arg5: memref<256x8xf32, #tpu.memory_space<vmem>>, %arg6: memref<128x1xf32, #tpu.memory_space<vmem>>, %arg7: memref<128x8xf32, #tpu.memory_space<vmem>>) attributes {dimension_semantics = [#tpu.dimension_semantics<parallel>], iteration_bounds = array<i64: 8>, scalar_prefetch = 0 : i64, scratch_operands = 0 : i64, tpu.core_type = #tpu.core_type<tc>, window_params = [{transform_indices = @transform_0, window_bounds = array<i64: 128, 32>}, {transform_indices = @transform_1, window_bounds = array<i64: 128, 32>}, {transform_indices = @transform_2, window_bounds = array<i64: 128, 256>}, {pipeline_mode = #tpu.pipeline_mode<synchronous>, transform_indices = @transform_3, window_bounds = array<i64: 32, 256>}, {pipeline_mode = #tpu.pipeline_mode<synchronous>, transform_indices = @transform_4, window_bounds = array<i64: 256, 8>}, {transform_indices = @transform_5, window_bounds = array<i64: 128, 1>}, {transform_indices = @transform_6, window_bounds = array<i64: 128, 8>}]} {
    %c0 = arith.constant 0 : index
    %c0_0 = arith.constant 0 : index
    %0 = vector.load %arg1[%c0, %c0_0] : memref<128x32xf32, #tpu.memory_space<vmem>>, vector<128x32xf32>
    %c0_1 = arith.constant 0 : index
    %c0_2 = arith.constant 0 : index
    %1 = vector.load %arg2[%c0_1, %c0_2] : memref<128x32xf32, #tpu.memory_space<vmem>>, vector<128x32xf32>
    %c0_3 = arith.constant 0 : index
    %c0_4 = arith.constant 0 : index
    %2 = vector.load %arg3[%c0_3, %c0_4] : memref<128x256xf32, #tpu.memory_space<vmem>>, vector<128x256xf32>
    %3 = arith.mulf %0, %1 : vector<128x32xf32>
    %cst = arith.constant dense<0.000000e+00> : vector<128xf32>
    %4 = vector.multi_reduction <add>, %3, %cst [1] : vector<128x32xf32> to vector<128xf32>
    %5 = vector.shape_cast %4 : vector<128xf32> to vector<128x1xf32>
    %c0_5 = arith.constant 0 : index
    %c0_6 = arith.constant 0 : index
    %6 = vector.load %arg6[%c0_5, %c0_6] : memref<128x1xf32, #tpu.memory_space<vmem>>, vector<128x1xf32>
    tpu.vector_store %arg6[%c0_5, %c0_6], %5 {strides = array<i32>} : memref<128x1xf32, #tpu.memory_space<vmem>>, vector<128x1xf32>,
    %c0_7 = arith.constant 0 : index
    %c0_8 = arith.constant 0 : index
    %7 = vector.load %arg4[%c0_7, %c0_8] : memref<32x256xf32, #tpu.memory_space<vmem>>, vector<32x256xf32>
    %cst_9 = arith.constant dense<0.000000e+00> : vector<128x256xf32>
    %8 = tpu.matmul %0, %7, %cst_9 {dimension_numbers = #tpu.dot_dimension_numbers<[1], [0], [0], [1], [0, 0, 1, 1], [], []>} : vector<128x32xf32>, vector<32x256xf32>, vector<128x256xf32> -> vector<128x256xf32>
    %9 = arith.mulf %8, %2 : vector<128x256xf32>
    %c0_10 = arith.constant 0 : index
    %c0_11 = arith.constant 0 : index
    %10 = vector.load %arg5[%c0_10, %c0_11] : memref<256x8xf32, #tpu.memory_space<vmem>>, vector<256x8xf32>
    %cst_12 = arith.constant dense<0.000000e+00> : vector<128x8xf32>
    %11 = tpu.matmul %9, %10, %cst_12 {dimension_numbers = #tpu.dot_dimension_numbers<[1], [0], [0], [1], [0, 0, 1, 1], [], []>} : vector<128x256xf32>, vector<256x8xf32>, vector<128x8xf32> -> vector<128x8xf32>
    %c0_13 = arith.constant 0 : index
    %c0_14 = arith.constant 0 : index
    %12 = vector.load %arg7[%c0_13, %c0_14] : memref<128x8xf32, #tpu.memory_space<vmem>>, vector<128x8xf32>
    tpu.vector_store %arg7[%c0_13, %c0_14], %11 {strides = array<i32>} : memref<128x8xf32, #tpu.memory_space<vmem>>, vector<128x8xf32>,
    return
  }
  func.func @transform_0(%arg0: i32) -> (i32, i32) {
    %c0_i32 = arith.constant 0 : i32
    %c0_i32_0 = arith.constant 0 : i32
    return %arg0, %c0_i32 : i32, i32
  }
  func.func @transform_1(%arg0: i32) -> (i32, i32) {
    %c0_i32 = arith.constant 0 : i32
    %c0_i32_0 = arith.constant 0 : i32
    return %arg0, %c0_i32 : i32, i32
  }
  func.func @transform_2(%arg0: i32) -> (i32, i32) {
    %c0_i32 = arith.constant 0 : i32
    %c0_i32_0 = arith.constant 0 : i32
    return %arg0, %c0_i32 : i32, i32
  }
  func.func @transform_3(%arg0: i32) -> (i32, i32) {
    %c0_i32 = arith.constant 0 : i32
    %c0_i32_0 = arith.constant 0 : i32
    %c0_i32_1 = arith.constant 0 : i32
    return %c0_i32, %c0_i32_0 : i32, i32
  }
  func.func @transform_4(%arg0: i32) -> (i32, i32) {
    %c0_i32 = arith.constant 0 : i32
    %c0_i32_0 = arith.constant 0 : i32
    %c0_i32_1 = arith.constant 0 : i32
    return %c0_i32, %c0_i32_0 : i32, i32
  }
  func.func @transform_5(%arg0: i32) -> (i32, i32) {
    %c0_i32 = arith.constant 0 : i32
    %c0_i32_0 = arith.constant 0 : i32
    return %arg0, %c0_i32 : i32, i32
  }
  func.func @transform_6(%arg0: i32) -> (i32, i32) {
    %c0_i32 = arith.constant 0 : i32
    %c0_i32_0 = arith.constant 0 : i32
    return %arg0, %c0_i32 : i32, i32
  }
}

</mosaic_0001>

<llo_original>
// kernel: tpu_custom_call.1
$region0: #{tpu_custom_call.1}
  #allocation0 [shape = 'u32[]', space=smem, size = 0x4, offset = 0x4, fixed_abs, tag = 'smem constant byte address 0x4 - core index']
  #allocation1 [shape = 'u32[144,128]{1,0:T(1,128)}', space=vmem, size = 0x12000, scoped, tag = 'internal scratch']
  %s0 = inlined_call_operand.vmem [shape: f32[1024,32], index: 0, kind: input, shape index: {}]
  %s1 = inlined_call_operand.vmem [shape: f32[1024,32], index: 1, kind: input, shape index: {}]
  %s2 = inlined_call_operand.vmem [shape: f32[1024,256], index: 2, kind: input, shape index: {}]
  %s3 = inlined_call_operand.vmem [shape: f32[32,256], index: 3, kind: input, shape index: {}]
  %s4 = inlined_call_operand.vmem [shape: f32[256,8], index: 4, kind: input, shape index: {}]
  %s5 = inlined_call_operand.vmem [shape: f32[1024,1], index: 5, kind: output, shape index: {0}]
  %s6 = inlined_call_operand.vmem [shape: f32[1024,8], index: 6, kind: output, shape index: {1}]
  %7 = xla_tuple %s5, %s6
  %s8 = sld [smem:[#allocation0]]
  $region61: #{tpu_custom_call.1} parent=0
    _
  %s10 = ssub.s32 1, %s8
  %s11 = scalar_select 0, %s10, %s8
  loop: start=0, step=1, limit=10
  $region2: #{tpu_custom_call.1} parent=0 // loop_pre_header
    _
  $region3: #{tpu_custom_call.1} parent=0 // loop_header
    %s13 = sphi 0, %s17
    %p14 = scmp.ge.s32.totalorder %s13, 10
    %s23 = sphi 0, %s25
    %s26 = sphi 0, %s23
    %s27 = sphi 0, %s26
    %s43 = sphi 0, %s27
    %s49 = sphi 0, %s51
    %s52 = sphi 0, %s49
    %s53 = sphi 0, %s52
    %s69 = sphi 0, %s53
    %s75 = sphi 0, %s77
    %s78 = sphi 0, %s75
    %s79 = sphi 0, %s78
    %s95 = sphi 0, %s79
    %s99 = sphi 0, %s99
    %s101 = sphi 0, %s99
    %s102 = sphi 0, %s101
    %s116 = sphi 0, %s102
    %s120 = sphi 0, %s120
    %s122 = sphi 0, %s120
    %s123 = sphi 0, %s122
    %s137 = sphi 0, %s123
    %s143 = sphi 0, %s145
    %s146 = sphi 0, %s143
    %s147 = sphi 0, %s146
    %s163 = sphi 0, %s147
    %s169 = sphi 0, %s171
    %s172 = sphi 0, %s169
    %s173 = sphi 0, %s172
    %s189 = sphi 0, %s173
  $region4: #{tpu_custom_call.1} parent=0 // loop_header_branch
    %16 = sbr.rel (%p14) target = $region8
  $region5: #{tpu_custom_call.1} parent=0 // loop_body
    %s18 = ssub.s32 %s13, 1
    %s19 = ssub.s32 %s13, 2
    %s20 = sadd.s32 %s13, 1
    %s21 = ssub.s32 %s13, %s20
    %p22 = scmp.eq.s32.totalorder %s21, 0
    %s24 = sadd.s32 %s23, 1
    %s25 = scalar_select %p22, %s23, %s24
    %p28 = pneg %p22
    %p29 = scmp.eq.s32.totalorder %s13, 7
    %p30 = por %p28, %p29
    %p31 = scmp.ne.s32.totalorder %s23, %s26
    %p32 = scmp.eq.s32.totalorder %s13, 0
    %p33 = por %p31, %p32
    %p34 = scmp.ne.s32.totalorder %s23, %s26
    %p35 = scmp.eq.s32.totalorder %s18, 7
    %p36 = por %p34, %p35
    %p37 = scmp.ne.s32.totalorder %s26, %s27
    %p38 = scmp.eq.s32.totalorder %s18, 0
    %p39 = por %p37, %p38
    %p40 = scmp.ne.s32.totalorder %s26, %s27
    %p41 = scmp.eq.s32.totalorder %s19, 7
    %p42 = por %p40, %p41
    %p44 = scmp.ne.s32.totalorder %s27, %s43
    %p45 = scmp.eq.s32.totalorder %s19, 0
    %p46 = por %p44, %p45
    %s47 = ssub.s32 %s13, %s20
    %p48 = scmp.eq.s32.totalorder %s47, 0
    %s50 = sadd.s32 %s49, 1
    %s51 = scalar_select %p48, %s49, %s50
    %p54 = pneg %p48
    %p55 = scmp.eq.s32.totalorder %s13, 7
    %p56 = por %p54, %p55
    %p57 = scmp.ne.s32.totalorder %s49, %s52
    %p58 = scmp.eq.s32.totalorder %s13, 0
    %p59 = por %p57, %p58
    %p60 = scmp.ne.s32.totalorder %s49, %s52
    %p61 = scmp.eq.s32.totalorder %s18, 7
    %p62 = por %p60, %p61
    %p63 = scmp.ne.s32.totalorder %s52, %s53
    %p64 = scmp.eq.s32.totalorder %s18, 0
    %p65 = por %p63, %p64
    %p66 = scmp.ne.s32.totalorder %s52, %s53
    %p67 = scmp.eq.s32.totalorder %s19, 7
    %p68 = por %p66, %p67
    %p70 = scmp.ne.s32.totalorder %s53, %s69
    %p71 = scmp.eq.s32.totalorder %s19, 0
    %p72 = por %p70, %p71
    %s73 = ssub.s32 %s13, %s20
    %p74 = scmp.eq.s32.totalorder %s73, 0
    %s76 = sadd.s32 %s75, 1
    %s77 = scalar_select %p74, %s75, %s76
    %p80 = pneg %p74
    %p81 = scmp.eq.s32.totalorder %s13, 7
    %p82 = por %p80, %p81
    %p83 = scmp.ne.s32.totalorder %s75, %s78
    %p84 = scmp.eq.s32.totalorder %s13, 0
    %p85 = por %p83, %p84
    %p86 = scmp.ne.s32.totalorder %s75, %s78
    %p87 = scmp.eq.s32.totalorder %s18, 7
    %p88 = por %p86, %p87
    %p89 = scmp.ne.s32.totalorder %s78, %s79
    %p90 = scmp.eq.s32.totalorder %s18, 0
    %p91 = por %p89, %p90
    %p92 = scmp.ne.s32.totalorder %s78, %s79
    %p93 = scmp.eq.s32.totalorder %s19, 7
    %p94 = por %p92, %p93
    %p96 = scmp.ne.s32.totalorder %s79, %s95
    %p97 = scmp.eq.s32.totalorder %s19, 0
    %p98 = por %p96, %p97
    %s100 = sadd.s32 %s99, 1
    %p103 = scmp.eq.s32.totalorder %s13, 7
    %p104 = scmp.ne.s32.totalorder %s99, %s101
    %p105 = scmp.eq.s32.totalorder %s13, 0
    %p106 = por %p104, %p105
    %p107 = scmp.ne.s32.totalorder %s99, %s101
    %p108 = scmp.eq.s32.totalorder %s18, 7
    %p109 = por %p107, %p108
    %p110 = scmp.ne.s32.totalorder %s101, %s102
    %p111 = scmp.eq.s32.totalorder %s18, 0
    %p112 = por %p110, %p111
    %p113 = scmp.ne.s32.totalorder %s101, %s102
    %p114 = scmp.eq.s32.totalorder %s19, 7
    %p115 = por %p113, %p114
    %p117 = scmp.ne.s32.totalorder %s102, %s116
    %p118 = scmp.eq.s32.totalorder %s19, 0
    %p119 = por %p117, %p118
    %s121 = sadd.s32 %s120, 1
    %p124 = scmp.eq.s32.totalorder %s13, 7
    %p125 = scmp.ne.s32.totalorder %s120, %s122
    %p126 = scmp.eq.s32.totalorder %s13, 0
    %p127 = por %p125, %p126
    %p128 = scmp.ne.s32.totalorder %s120, %s122
    %p129 = scmp.eq.s32.totalorder %s18, 7
    %p130 = por %p128, %p129
    %p131 = scmp.ne.s32.totalorder %s122, %s123
    %p132 = scmp.eq.s32.totalorder %s18, 0
    %p133 = por %p131, %p132
    %p134 = scmp.ne.s32.totalorder %s122, %s123
    %p135 = scmp.eq.s32.totalorder %s19, 7
    %p136 = por %p134, %p135
    %p138 = scmp.ne.s32.totalorder %s123, %s137
    %p139 = scmp.eq.s32.totalorder %s19, 0
    %p140 = por %p138, %p139
    %s141 = ssub.s32 %s13, %s20
    %p142 = scmp.eq.s32.totalorder %s141, 0
    %s144 = sadd.s32 %s143, 1
    %s145 = scalar_select %p142, %s143, %s144
    %p148 = pneg %p142
    %p149 = scmp.eq.s32.totalorder %s13, 7
    %p150 = por %p148, %p149
    %p151 = scmp.ne.s32.totalorder %s143, %s146
    %p152 = scmp.eq.s32.totalorder %s13, 0
    %p153 = por %p151, %p152
    %p154 = scmp.ne.s32.totalorder %s143, %s146
    %p155 = scmp.eq.s32.totalorder %s18, 7
    %p156 = por %p154, %p155
    %p157 = scmp.ne.s32.totalorder %s146, %s147
    %p158 = scmp.eq.s32.totalorder %s18, 0
    %p159 = por %p157, %p158
    %p160 = scmp.ne.s32.totalorder %s146, %s147
    %p161 = scmp.eq.s32.totalorder %s19, 7
    %p162 = por %p160, %p161
    %p164 = scmp.ne.s32.totalorder %s147, %s163
    %p165 = scmp.eq.s32.totalorder %s19, 0
    %p166 = por %p164, %p165
    %s167 = ssub.s32 %s13, %s20
    %p168 = scmp.eq.s32.totalorder %s167, 0
    %s170 = sadd.s32 %s169, 1
    %s171 = scalar_select %p168, %s169, %s170
    %p174 = pneg %p168
    %p175 = scmp.eq.s32.totalorder %s13, 7
    %p176 = por %p174, %p175
    %p177 = scmp.ne.s32.totalorder %s169, %s172
    %p178 = scmp.eq.s32.totalorder %s13, 0
    %p179 = por %p177, %p178
    %p180 = scmp.ne.s32.totalorder %s169, %s172
    %p181 = scmp.eq.s32.totalorder %s18, 7
    %p182 = por %p180, %p181
    %p183 = scmp.ne.s32.totalorder %s172, %s173
    %p184 = scmp.eq.s32.totalorder %s18, 0
    %p185 = por %p183, %p184
    %p186 = scmp.ne.s32.totalorder %s172, %s173
    %p187 = scmp.eq.s32.totalorder %s19, 7
    %p188 = por %p186, %p187
    %p190 = scmp.ne.s32.totalorder %s173, %s189
    %p191 = scmp.eq.s32.totalorder %s19, 0
    %p192 = por %p190, %p191
    %p193 = scmp.le.s32.totalorder 1, %s13
    %p194 = scmp.lt.s32.totalorder %s13, 9
    %p195 = pnand %p193, %p194
    %p196 = pneg %p195
    // Predicated region
    $region9: #{tpu_custom_call.1} parent=5 // pred_check
      _
    $region10: #{tpu_custom_call.1} parent=5 // pred_check_branch
      %198 = sbr.rel (%p195) target = $region12
    $region11: #{tpu_custom_call.1} parent=5 // pred_region
      %s199 = ssub.s32 %s13, 1
      // Predicated region
      $region13: #{tpu_custom_call.1} parent=11 // pred_check
        %p200 = pneg %p112
      $region14: #{tpu_custom_call.1} parent=11 // pred_check_branch
        %202 = sbr.rel (%p200) target = $region16
      $region15: #{tpu_custom_call.1} parent=11 // pred_region
        _
      $region16: #{tpu_custom_call.1} parent=11 // pred_fallthru
        _
      // Predicated region
      $region17: #{tpu_custom_call.1} parent=11 // pred_check
        %p203 = pneg %p133
      $region18: #{tpu_custom_call.1} parent=11 // pred_check_branch
        %205 = sbr.rel (%p203) target = $region20
      $region19: #{tpu_custom_call.1} parent=11 // pred_region
        _
      $region20: #{tpu_custom_call.1} parent=11 // pred_fallthru
        _
    $region12: #{tpu_custom_call.1} parent=5 // pred_fallthru
      _
    %p206 = scmp.lt.s32.totalorder %s13, 8
    // Predicated region
    $region21: #{tpu_custom_call.1} parent=5 // pred_check
      %p207 = pneg %p206
    $region22: #{tpu_custom_call.1} parent=5 // pred_check_branch
      %209 = sbr.rel (%p207) target = $region24
    $region23: #{tpu_custom_call.1} parent=5 // pred_region
      // Predicated region
      $region25: #{tpu_custom_call.1} parent=23 // pred_check
        %p210 = pneg %p33
      $region26: #{tpu_custom_call.1} parent=23 // pred_check_branch
        %212 = sbr.rel (%p210) target = $region28
      $region27: #{tpu_custom_call.1} parent=23 // pred_region
        %s213 = smul.u32 16, %s13
        %p214 = scmp.lt.s32.totalorder %s213, 127
        %s215 = scalar_select %p214, %s213, 127
        %s216 = smul.addr %s215, 8
        %s217 = scalar_lea.vmem %s0, %s216
        %s218 = smul.u32 16, %s13
      $region28: #{tpu_custom_call.1} parent=23 // pred_fallthru
        _
      // Predicated region
      $region29: #{tpu_custom_call.1} parent=23 // pred_check
        %p219 = pneg %p59
      $region30: #{tpu_custom_call.1} parent=23 // pred_check_branch
        %221 = sbr.rel (%p219) target = $region32
      $region31: #{tpu_custom_call.1} parent=23 // pred_region
        %s222 = smul.u32 16, %s13
        %p223 = scmp.lt.s32.totalorder %s222, 127
        %s224 = scalar_select %p223, %s222, 127
        %s225 = smul.addr %s224, 8
        %s226 = scalar_lea.vmem %s1, %s225
        %s227 = smul.u32 16, %s13
      $region32: #{tpu_custom_call.1} parent=23 // pred_fallthru
        _
      // Predicated region
      $region33: #{tpu_custom_call.1} parent=23 // pred_check
        %p228 = pneg %p85
      $region34: #{tpu_custom_call.1} parent=23 // pred_check_branch
        %230 = sbr.rel (%p228) target = $region36
      $region35: #{tpu_custom_call.1} parent=23 // pred_region
        %s231 = smul.u32 16, %s13
        %p232 = scmp.lt.s32.totalorder %s231, 127
        %s233 = scalar_select %p232, %s231, 127
        %s234 = smul.addr %s233, 2
        %s235 = smul.addr %s234, 8
        %s236 = scalar_lea.vmem %s2, %s235
        %s237 = smul.u32 16, %s13
      $region36: #{tpu_custom_call.1} parent=23 // pred_fallthru
        _
    $region24: #{tpu_custom_call.1} parent=5 // pred_fallthru
      _
    %p238 = scmp.le.s32.totalorder 1, %s13
    %p239 = scmp.lt.s32.totalorder %s13, 9
    %p240 = pnand %p238, %p239
    %p241 = pneg %p240
    // Predicated region
    $region37: #{tpu_custom_call.1} parent=5 // pred_check
      _
    $region38: #{tpu_custom_call.1} parent=5 // pred_check_branch
      %243 = sbr.rel (%p240) target = $region40
    $region39: #{tpu_custom_call.1} parent=5 // pred_region
      %s244 = ssub.s32 %s13, 1
      %s245 = smul.u32 16, %s18
      %p246 = scmp.lt.s32.totalorder %s245, 127
      %s247 = scalar_select %p246, %s245, 127
      %s248 = smul.addr %s247, 8
      %s249 = scalar_lea.vmem %s0, %s248
      %p250 = pneg %p39
      %p251 = pneg %p36
      %s252 = smul.u32 16, %s18
      %p253 = scmp.lt.s32.totalorder %s252, 127
      %s254 = scalar_select %p253, %s252, 127
      %s255 = smul.addr %s254, 8
      %s256 = scalar_lea.vmem %s1, %s255
      %p257 = pneg %p65
      %p258 = pneg %p62
      %s259 = smul.u32 16, %s18
      %p260 = scmp.lt.s32.totalorder %s259, 127
      %s261 = scalar_select %p260, %s259, 127
      %s262 = smul.addr %s261, 2
      %s263 = smul.addr %s262, 8
      %s264 = scalar_lea.vmem %s2, %s263
      %p265 = pneg %p91
      %p266 = pneg %p88
      %p267 = pneg %p112
      %p268 = pneg %p109
      %p269 = pneg %p133
      %p270 = pneg %p130
      %p271 = pneg %p159
      %p272 = pneg %p156
      %s273 = smul.u32 16, %s18
      %p274 = scmp.lt.s32.totalorder %s273, 127
      %s275 = scalar_select %p274, %s273, 127
      %s276 = smul.addr %s275, 8
      %s277 = scalar_lea.vmem %s5, %s276
      %p278 = pneg %p185
      %p279 = pneg %p182
      %s280 = smul.u32 16, %s18
      %p281 = scmp.lt.s32.totalorder %s280, 127
      %s282 = scalar_select %p281, %s280, 127
      %s283 = smul.addr %s282, 8
      %s284 = scalar_lea.vmem %s6, %s283
      %s285 = smul.u32 16, %s18
      %p286 = scmp.lt.s32.totalorder %s285, 127
      %s287 = scalar_select %p286, %s285, 127
      %s288 = smul.addr %s287, 8
      %s289 = scalar_lea.vmem %s0, %s288
      %s290 = smul.u32 16, %s18
      %s291 = smul.u32 16, %s18
      %p292 = scmp.lt.s32.totalorder %s291, 127
      %s293 = scalar_select %p292, %s291, 127
      %s294 = smul.addr %s293, 8
      %s295 = scalar_lea.vmem %s1, %s294
      %s296 = smul.u32 16, %s18
      %s297 = smul.u32 16, %s18
      %p298 = scmp.lt.s32.totalorder %s297, 127
      %s299 = scalar_select %p298, %s297, 127
      %s300 = smul.addr %s299, 2
      %s301 = smul.addr %s300, 8
      %s302 = scalar_lea.vmem %s2, %s301
      %s303 = smul.u32 16, %s18
      %s304 = smul.u32 16, %s18
      %p305 = scmp.lt.s32.totalorder %s304, 127
      %s306 = scalar_select %p305, %s304, 127
      %s307 = smul.addr %s306, 8
      %s308 = scalar_lea.vmem %s5, %s307
      %s309 = smul.u32 16, %s18
      %s310 = smul.u32 16, %s18
      %p311 = scmp.lt.s32.totalorder %s310, 127
      %s312 = scalar_select %p311, %s310, 127
      %s313 = smul.addr %s312, 8
      %s314 = scalar_lea.vmem %s6, %s313
      %s315 = smul.u32 16, %s18
      %v316 = vld [vmem:[%s289] sm:$0xff]
      %v317 = vld [vmem:[%s289 + $0x8] sm:$0xff]
      %v318 = vld [vmem:[%s289 + $0x10] sm:$0xff]
      %v319 = vld [vmem:[%s289 + $0x18] sm:$0xff]
      %v320 = vld [vmem:[%s289 + $0x20] sm:$0xff]
      %v321 = vld [vmem:[%s289 + $0x28] sm:$0xff]
      %v322 = vld [vmem:[%s289 + $0x30] sm:$0xff]
      %v323 = vld [vmem:[%s289 + $0x38] sm:$0xff]
      %v324 = vld [vmem:[%s289 + $0x40] sm:$0xff]
      %v325 = vld [vmem:[%s289 + $0x48] sm:$0xff]
      %v326 = vld [vmem:[%s289 + $0x50] sm:$0xff]
      %v327 = vld [vmem:[%s289 + $0x58] sm:$0xff]
      %v328 = vld [vmem:[%s289 + $0x60] sm:$0xff]
      %v329 = vld [vmem:[%s289 + $0x68] sm:$0xff]
      %v330 = vld [vmem:[%s289 + $0x70] sm:$0xff]
      %v331 = vld [vmem:[%s289 + $0x78] sm:$0xff]
      %v332 = vld [vmem:[%s295] sm:$0xff]
      %v333 = vld [vmem:[%s295 + $0x8] sm:$0xff]
      %v334 = vld [vmem:[%s295 + $0x10] sm:$0xff]
      %v335 = vld [vmem:[%s295 + $0x18] sm:$0xff]
      %v336 = vld [vmem:[%s295 + $0x20] sm:$0xff]
      %v337 = vld [vmem:[%s295 + $0x28] sm:$0xff]
      %v338 = vld [vmem:[%s295 + $0x30] sm:$0xff]
      %v339 = vld [vmem:[%s295 + $0x38] sm:$0xff]
      %v340 = vld [vmem:[%s295 + $0x40] sm:$0xff]
      %v341 = vld [vmem:[%s295 + $0x48] sm:$0xff]
      %v342 = vld [vmem:[%s295 + $0x50] sm:$0xff]
      %v343 = vld [vmem:[%s295 + $0x58] sm:$0xff]
      %v344 = vld [vmem:[%s295 + $0x60] sm:$0xff]
      %v345 = vld [vmem:[%s295 + $0x68] sm:$0xff]
      %v346 = vld [vmem:[%s295 + $0x70] sm:$0xff]
      %v347 = vld [vmem:[%s295 + $0x78] sm:$0xff]
      %v348 = vld [vmem:[%s302] sm:$0xff]
      %v349 = vld [vmem:[%s302 + $0x8] sm:$0xff]
      %v350 = vld [vmem:[%s302 + $0x10] sm:$0xff]
      %v351 = vld [vmem:[%s302 + $0x18] sm:$0xff]
      %v352 = vld [vmem:[%s302 + $0x20] sm:$0xff]
      %v353 = vld [vmem:[%s302 + $0x28] sm:$0xff]
      %v354 = vld [vmem:[%s302 + $0x30] sm:$0xff]
      %v355 = vld [vmem:[%s302 + $0x38] sm:$0xff]
      %v356 = vld [vmem:[%s302 + $0x40] sm:$0xff]
      %v357 = vld [vmem:[%s302 + $0x48] sm:$0xff]
      %v358 = vld [vmem:[%s302 + $0x50] sm:$0xff]
      %v359 = vld [vmem:[%s302 + $0x58] sm:$0xff]
      %v360 = vld [vmem:[%s302 + $0x60] sm:$0xff]
      %v361 = vld [vmem:[%s302 + $0x68] sm:$0xff]
      %v362 = vld [vmem:[%s302 + $0x70] sm:$0xff]
      %v363 = vld [vmem:[%s302 + $0x78] sm:$0xff]
      %v364 = vld [vmem:[%s302 + $0x80] sm:$0xff]
      %v365 = vld [vmem:[%s302 + $0x88] sm:$0xff]
      %v366 = vld [vmem:[%s302 + $0x90] sm:$0xff]
      %v367 = vld [vmem:[%s302 + $0x98] sm:$0xff]
      %v368 = vld [vmem:[%s302 + $0xa0] sm:$0xff]
      %v369 = vld [vmem:[%s302 + $0xa8] sm:$0xff]
      %v370 = vld [vmem:[%s302 + $0xb0] sm:$0xff]
      %v371 = vld [vmem:[%s302 + $0xb8] sm:$0xff]
      %v372 = vld [vmem:[%s302 + $0xc0] sm:$0xff]
      %v373 = vld [vmem:[%s302 + $0xc8] sm:$0xff]
      %v374 = vld [vmem:[%s302 + $0xd0] sm:$0xff]
      %v375 = vld [vmem:[%s302 + $0xd8] sm:$0xff]
      %v376 = vld [vmem:[%s302 + $0xe0] sm:$0xff]
      %v377 = vld [vmem:[%s302 + $0xe8] sm:$0xff]
      %v378 = vld [vmem:[%s302 + $0xf0] sm:$0xff]
      %v379 = vld [vmem:[%s302 + $0xf8] sm:$0xff]
      %v380 = vmul.f32 %v316, %v332
      %v381 = vmul.f32 %v317, %v333
      %v382 = vmul.f32 %v318, %v334
      %v383 = vmul.f32 %v319, %v335
      %v384 = vmul.f32 %v320, %v336
      %v385 = vmul.f32 %v321, %v337
      %v386 = vmul.f32 %v322, %v338
      %v387 = vmul.f32 %v323, %v339
      %v388 = vmul.f32 %v324, %v340
      %v389 = vmul.f32 %v325, %v341
      %v390 = vmul.f32 %v326, %v342
      %v391 = vmul.f32 %v327, %v343
      %v392 = vmul.f32 %v328, %v344
      %v393 = vmul.f32 %v329, %v345
      %v394 = vmul.f32 %v330, %v346
      %v395 = vmul.f32 %v331, %v347
      %vm396 = vcmask 261120
      %v397 = vsel %vm396, %v380, 0.0
      %398 = vadd.xlane.f32.xlu0 %v397
      %v399 = vpop.xlane.xlu0 %398
      %v400 = vsel %vm396, %v381, 0.0
      %401 = vadd.xlane.f32.xlu0 %v400
      %v402 = vpop.xlane.xlu0 %401
      %v403 = vsel %vm396, %v382, 0.0
      %404 = vadd.xlane.f32.xlu0 %v403
      %v405 = vpop.xlane.xlu0 %404
      %v406 = vsel %vm396, %v383, 0.0
      %407 = vadd.xlane.f32.xlu0 %v406
      %v408 = vpop.xlane.xlu0 %407
      %v409 = vsel %vm396, %v384, 0.0
      %410 = vadd.xlane.f32.xlu0 %v409
      %v411 = vpop.xlane.xlu0 %410
      %v412 = vsel %vm396, %v385, 0.0
      %413 = vadd.xlane.f32.xlu0 %v412
      %v414 = vpop.xlane.xlu0 %413
      %v415 = vsel %vm396, %v386, 0.0
      %416 = vadd.xlane.f32.xlu0 %v415
      %v417 = vpop.xlane.xlu0 %416
      %v418 = vsel %vm396, %v387, 0.0
      %419 = vadd.xlane.f32.xlu0 %v418
      %v420 = vpop.xlane.xlu0 %419
      %v421 = vsel %vm396, %v388, 0.0
      %422 = vadd.xlane.f32.xlu0 %v421
      %v423 = vpop.xlane.xlu0 %422
      %v424 = vsel %vm396, %v389, 0.0
      %425 = vadd.xlane.f32.xlu0 %v424
      %v426 = vpop.xlane.xlu0 %425
      %v427 = vsel %vm396, %v390, 0.0
      %428 = vadd.xlane.f32.xlu0 %v427
      %v429 = vpop.xlane.xlu0 %428
      %v430 = vsel %vm396, %v391, 0.0
      %431 = vadd.xlane.f32.xlu0 %v430
      %v432 = vpop.xlane.xlu0 %431
      %v433 = vsel %vm396, %v392, 0.0
      %434 = vadd.xlane.f32.xlu0 %v433
      %v435 = vpop.xlane.xlu0 %434
      %v436 = vsel %vm396, %v393, 0.0
      %437 = vadd.xlane.f32.xlu0 %v436
      %v438 = vpop.xlane.xlu0 %437
      %v439 = vsel %vm396, %v394, 0.0
      %440 = vadd.xlane.f32.xlu0 %v439
      %v441 = vpop.xlane.xlu0 %440
      %v442 = vsel %vm396, %v395, 0.0
      %443 = vadd.xlane.f32.xlu0 %v442
      %v444 = vpop.xlane.xlu0 %443
      %vm445 = vcmask 7168
      %446 = vst.msk [vmem:[%s308] sm:$0xff] %vm445, %v399
      %447 = vst.msk [vmem:[%s308 + $0x8] sm:$0xff] %vm445, %v402
      %448 = vst.msk [vmem:[%s308 + $0x10] sm:$0xff] %vm445, %v405
      %449 = vst.msk [vmem:[%s308 + $0x18] sm:$0xff] %vm445, %v408
      %450 = vst.msk [vmem:[%s308 + $0x20] sm:$0xff] %vm445, %v411
      %451 = vst.msk [vmem:[%s308 + $0x28] sm:$0xff] %vm445, %v414
      %452 = vst.msk [vmem:[%s308 + $0x30] sm:$0xff] %vm445, %v417
      %453 = vst.msk [vmem:[%s308 + $0x38] sm:$0xff] %vm445, %v420
      %454 = vst.msk [vmem:[%s308 + $0x40] sm:$0xff] %vm445, %v423
      %455 = vst.msk [vmem:[%s308 + $0x48] sm:$0xff] %vm445, %v426
      %456 = vst.msk [vmem:[%s308 + $0x50] sm:$0xff] %vm445, %v429
      %457 = vst.msk [vmem:[%s308 + $0x58] sm:$0xff] %vm445, %v432
      %458 = vst.msk [vmem:[%s308 + $0x60] sm:$0xff] %vm445, %v435
      %459 = vst.msk [vmem:[%s308 + $0x68] sm:$0xff] %vm445, %v438
      %460 = vst.msk [vmem:[%s308 + $0x70] sm:$0xff] %vm445, %v441
      %461 = vst.msk [vmem:[%s308 + $0x78] sm:$0xff] %vm445, %v444
      %v462 = vld [vmem:[%s3] sm:$0xff]
      %v463 = vld [vmem:[%s3 + $0x8] sm:$0xff]
      %v464 = vld [vmem:[%s3 + $0x10] sm:$0xff]
      %v465 = vld [vmem:[%s3 + $0x18] sm:$0xff]
      %v466 = vld [vmem:[%s3 + $0x20] sm:$0xff]
      %v467 = vld [vmem:[%s3 + $0x28] sm:$0xff]
      %v468 = vld [vmem:[%s3 + $0x30] sm:$0xff]
      %v469 = vld [vmem:[%s3 + $0x38] sm:$0xff]
      %v471 = vsel %vm396, %v316, 0
      %v474 = vsel %vm396, %v317, 0
      %v477 = vsel %vm396, %v318, 0
      %v480 = vsel %vm396, %v319, 0
      %v483 = vsel %vm396, %v320, 0
      %v486 = vsel %vm396, %v321, 0
      %v489 = vsel %vm396, %v322, 0
      %v492 = vsel %vm396, %v323, 0
      %v495 = vsel %vm396, %v324, 0
      %v498 = vsel %vm396, %v325, 0
      %v501 = vsel %vm396, %v326, 0
      %v504 = vsel %vm396, %v327, 0
      %v507 = vsel %vm396, %v328, 0
      %v510 = vsel %vm396, %v329, 0
      %v513 = vsel %vm396, %v330, 0
      %v516 = vsel %vm396, %v331, 0
      %518 = vmatprep.subr.mxu0 %v463
      %519 = vmatpush1.msra.mxu0 %v462
      %520 = vmatprep.subr.mxu0 %v465
      %521 = vmatpush1.msra.mxu0 %v464
      %522 = vmatprep.subr.mxu0 %v467
      %523 = vmatpush1.msra.mxu0 %v466
      %524 = vmatprep.subr.mxu0 %v469
      %525 = vmatpush1.msra.mxu0 %v468
      %526 = vmatprep.subr.mxu0 0.0
      %527 = vmatpush1.msra.mxu0 0.0
      %528 = vmatprep.subr.mxu0 0.0
      %529 = vmatpush1.msra.mxu0 0.0
      %530 = vmatprep.subr.mxu0 0.0
      %531 = vmatpush1.msra.mxu0 0.0
      %532 = vmatprep.subr.mxu0 0.0
      %533 = vmatpush1.msra.mxu0 0.0
      %534 = vmatprep.subr.mxu0 0.0
      %535 = vmatpush1.msra.mxu0 0.0
      %536 = vmatprep.subr.mxu0 0.0
      %537 = vmatpush1.msra.mxu0 0.0
      %538 = vmatprep.subr.mxu0 0.0
      %539 = vmatpush1.msra.mxu0 0.0
      %540 = vmatprep.subr.mxu0 0.0
      %541 = vmatpush1.msra.mxu0 0.0
      %542 = vmatprep.subr.mxu0 0.0
      %543 = vmatpush1.msra.mxu0 0.0
      %544 = vmatprep.subr.mxu0 0.0
      %545 = vmatpush1.msra.mxu0 0.0
      %546 = vmatprep.subr.mxu0 0.0
      %547 = vmatpush1.msra.mxu0 0.0
      %548 = vmatprep.subr.mxu0 0.0
      %549 = vmatpush1.msra.mxu0 0.0
      %550 = vmatprep.subr.mxu0 0.0
      %551 = vmatpush1.msra.mxu0 0.0
      %552 = vmatprep.subr.mxu0 0.0
      %553 = vmatpush1.msra.mxu0 0.0
      %554 = vmatprep.subr.mxu0 0.0
      %555 = vmatpush1.msra.mxu0 0.0
      %556 = vmatprep.subr.mxu0 0.0
      %557 = vmatpush1.msra.mxu0 0.0
      %558 = vmatprep.subr.mxu0 0.0
      %559 = vmatpush1.msra.mxu0 0.0
      %560 = vmatprep.subr.mxu0 0.0
      %561 = vmatpush1.msra.mxu0 0.0
      %562 = vmatprep.subr.mxu0 0.0
      %563 = vmatpush1.msra.mxu0 0.0
      %564 = vmatprep.subr.mxu0 0.0
      %565 = vmatpush1.msra.mxu0 0.0
      %566 = vmatprep.subr.mxu0 0.0
      %567 = vmatpush1.msra.mxu0 0.0
      %568 = vmatprep.subr.mxu0 0.0
      %569 = vmatpush1.msra.mxu0 0.0
      %570 = vmatprep.subr.mxu0 0.0
      %571 = vmatpush1.msra.mxu0 0.0
      %572 = vmatprep.subr.mxu0 0.0
      %573 = vmatpush1.msra.mxu0 0.0
      %574 = vmatprep.subr.mxu0 0.0
      %575 = vmatpush1.msra.mxu0 0.0
      %576 = vmatprep.subr.mxu0 0.0
      %577 = vmatpush1.msra.mxu0 0.0
      %578 = vmatprep.subr.mxu0 0.0
      %579 = vmatpush1.msra.mxu0 0.0
      %580 = vmatprep.subr.mxu0 0.0
      %581 = vmatpush1.msra.mxu0 0.0
      %582 = vmatprep.mubr.f32.mxu0 0.0
      %583 = vmatmul.mubr.f32.gmra.mrb[0].mxu0 %v471
      %v584 = vpop.f32.mrb[0].mxu0
      %v585 = vadd.f32 0.0, %v584
      %v586 = vpop.f32.mrb[0].mxu0
      %v587 = vadd.f32 0.0, %v586
      %588 = vmatprep.mubr.f32.mxu0 0.0
      %589 = vmatmul.mubr.f32.gmra.mrb[0].mxu0 %v474
      %v590 = vpop.f32.mrb[0].mxu0
      %v591 = vadd.f32 0.0, %v590
      %v592 = vpop.f32.mrb[0].mxu0
      %v593 = vadd.f32 0.0, %v592
      %594 = vmatprep.mubr.f32.mxu0 0.0
      %595 = vmatmul.mubr.f32.gmra.mrb[0].mxu0 %v477
      %v596 = vpop.f32.mrb[0].mxu0
      %v597 = vadd.f32 0.0, %v596
      %v598 = vpop.f32.mrb[0].mxu0
      %v599 = vadd.f32 0.0, %v598
      %600 = vmatprep.mubr.f32.mxu0 0.0
      %601 = vmatmul.mubr.f32.gmra.mrb[0].mxu0 %v480
      %v602 = vpop.f32.mrb[0].mxu0
      %v603 = vadd.f32 0.0, %v602
      %v604 = vpop.f32.mrb[0].mxu0
      %v605 = vadd.f32 0.0, %v604
      %606 = vmatprep.mubr.f32.mxu0 0.0
      %607 = vmatmul.mubr.f32.gmra.mrb[0].mxu0 %v483
      %v608 = vpop.f32.mrb[0].mxu0
      %v609 = vadd.f32 0.0, %v608
      %v610 = vpop.f32.mrb[0].mxu0
      %v611 = vadd.f32 0.0, %v610
      %612 = vmatprep.mubr.f32.mxu0 0.0
      %613 = vmatmul.mubr.f32.gmra.mrb[0].mxu0 %v486
      %v614 = vpop.f32.mrb[0].mxu0
      %v615 = vadd.f32 0.0, %v614
      %v616 = vpop.f32.mrb[0].mxu0
      %v617 = vadd.f32 0.0, %v616
      %618 = vmatprep.mubr.f32.mxu0 0.0
      %619 = vmatmul.mubr.f32.gmra.mrb[0].mxu0 %v489
      %v620 = vpop.f32.mrb[0].mxu0
      %v621 = vadd.f32 0.0, %v620
      %v622 = vpop.f32.mrb[0].mxu0
      %v623 = vadd.f32 0.0, %v622
      %624 = vmatprep.mubr.f32.mxu0 0.0
      %625 = vmatmul.mubr.f32.gmra.mrb[0].mxu0 %v492
      %v626 = vpop.f32.mrb[0].mxu0
      %v627 = vadd.f32 0.0, %v626
      %v628 = vpop.f32.mrb[0].mxu0
      %v629 = vadd.f32 0.0, %v628
      %630 = vmatprep.mubr.f32.mxu0 0.0
      %631 = vmatmul.mubr.f32.gmra.mrb[0].mxu0 %v495
      %v632 = vpop.f32.mrb[0].mxu0
      %v633 = vadd.f32 0.0, %v632
      %v634 = vpop.f32.mrb[0].mxu0
      %v635 = vadd.f32 0.0, %v634
      %636 = vmatprep.mubr.f32.mxu0 0.0
      %637 = vmatmul.mubr.f32.gmra.mrb[0].mxu0 %v498
      %v638 = vpop.f32.mrb[0].mxu0
      %v639 = vadd.f32 0.0, %v638
      %v640 = vpop.f32.mrb[0].mxu0
      %v641 = vadd.f32 0.0, %v640
      %642 = vmatprep.mubr.f32.mxu0 0.0
      %643 = vmatmul.mubr.f32.gmra.mrb[0].mxu0 %v501
      %v644 = vpop.f32.mrb[0].mxu0
      %v645 = vadd.f32 0.0, %v644
      %v646 = vpop.f32.mrb[0].mxu0
      %v647 = vadd.f32 0.0, %v646
      %648 = vmatprep.mubr.f32.mxu0 0.0
      %649 = vmatmul.mubr.f32.gmra.mrb[0].mxu0 %v504
      %v650 = vpop.f32.mrb[0].mxu0
      %v651 = vadd.f32 0.0, %v650
      %v652 = vpop.f32.mrb[0].mxu0
      %v653 = vadd.f32 0.0, %v652
      %654 = vmatprep.mubr.f32.mxu0 0.0
      %655 = vmatmul.mubr.f32.gmra.mrb[0].mxu0 %v507
      %v656 = vpop.f32.mrb[0].mxu0
      %v657 = vadd.f32 0.0, %v656
      %v658 = vpop.f32.mrb[0].mxu0
      %v659 = vadd.f32 0.0, %v658
      %660 = vmatprep.mubr.f32.mxu0 0.0
      %661 = vmatmul.mubr.f32.gmra.mrb[0].mxu0 %v510
      %v662 = vpop.f32.mrb[0].mxu0
      %v663 = vadd.f32 0.0, %v662
      %v664 = vpop.f32.mrb[0].mxu0
      %v665 = vadd.f32 0.0, %v664
      %666 = vmatprep.mubr.f32.mxu0 0.0
      %667 = vmatmul.mubr.f32.gmra.mrb[0].mxu0 %v513
      %v668 = vpop.f32.mrb[0].mxu0
      %v669 = vadd.f32 0.0, %v668
      %v670 = vpop.f32.mrb[0].mxu0
      %v671 = vadd.f32 0.0, %v670
      %672 = vmatprep.mubr.f32.mxu0 0.0
      %673 = vmatmul.mubr.f32.gmra.mrb[0].mxu0 %v516
      %v674 = vpop.f32.mrb[0].mxu0
      %v675 = vadd.f32 0.0, %v674
      %v676 = vpop.f32.mrb[0].mxu0
      %v677 = vadd.f32 0.0, %v676
      %678 = vdwg.mxu0
      %v679 = vmul.f32 %v585, %v348
      %v680 = vmul.f32 %v587, %v349
      %v681 = vmul.f32 %v591, %v350
      %v682 = vmul.f32 %v593, %v351
      %v683 = vmul.f32 %v597, %v352
      %v684 = vmul.f32 %v599, %v353
      %v685 = vmul.f32 %v603, %v354
      %v686 = vmul.f32 %v605, %v355
      %v687 = vmul.f32 %v609, %v356
      %v688 = vmul.f32 %v611, %v357
      %v689 = vmul.f32 %v615, %v358
      %v690 = vmul.f32 %v617, %v359
      %v691 = vmul.f32 %v621, %v360
      %v692 = vmul.f32 %v623, %v361
      %v693 = vmul.f32 %v627, %v362
      %v694 = vmul.f32 %v629, %v363
      %v695 = vmul.f32 %v633, %v364
      %v696 = vmul.f32 %v635, %v365
      %v697 = vmul.f32 %v639, %v366
      %v698 = vmul.f32 %v641, %v367
      %v699 = vmul.f32 %v645, %v368
      %v700 = vmul.f32 %v647, %v369
      %v701 = vmul.f32 %v651, %v370
      %v702 = vmul.f32 %v653, %v371
      %v703 = vmul.f32 %v657, %v372
      %v704 = vmul.f32 %v659, %v373
      %v705 = vmul.f32 %v663, %v374
      %v706 = vmul.f32 %v665, %v375
      %v707 = vmul.f32 %v669, %v376
      %v708 = vmul.f32 %v671, %v377
      %v709 = vmul.f32 %v675, %v378
      %v710 = vmul.f32 %v677, %v379
      %v711 = vld [vmem:[%s4] sm:$0xff]
      %v712 = vld [vmem:[%s4 + $0x8] sm:$0xff]
      %v713 = vld [vmem:[%s4 + $0x10] sm:$0xff]
      %v714 = vld [vmem:[%s4 + $0x18] sm:$0xff]
      %v715 = vld [vmem:[%s4 + $0x20] sm:$0xff]
      %v716 = vld [vmem:[%s4 + $0x28] sm:$0xff]
      %v717 = vld [vmem:[%s4 + $0x30] sm:$0xff]
      %v718 = vld [vmem:[%s4 + $0x38] sm:$0xff]
      %v719 = vld [vmem:[%s4 + $0x40] sm:$0xff]
      %v720 = vld [vmem:[%s4 + $0x48] sm:$0xff]
      %v721 = vld [vmem:[%s4 + $0x50] sm:$0xff]
      %v722 = vld [vmem:[%s4 + $0x58] sm:$0xff]
      %v723 = vld [vmem:[%s4 + $0x60] sm:$0xff]
      %v724 = vld [vmem:[%s4 + $0x68] sm:$0xff]
      %v725 = vld [vmem:[%s4 + $0x70] sm:$0xff]
      %v726 = vld [vmem:[%s4 + $0x78] sm:$0xff]
      %v727 = vld [vmem:[%s4 + $0x80] sm:$0xff]
      %v728 = vld [vmem:[%s4 + $0x88] sm:$0xff]
      %v729 = vld [vmem:[%s4 + $0x90] sm:$0xff]
      %v730 = vld [vmem:[%s4 + $0x98] sm:$0xff]
      %v731 = vld [vmem:[%s4 + $0xa0] sm:$0xff]
      %v732 = vld [vmem:[%s4 + $0xa8] sm:$0xff]
      %v733 = vld [vmem:[%s4 + $0xb0] sm:$0xff]
      %v734 = vld [vmem:[%s4 + $0xb8] sm:$0xff]
      %v735 = vld [vmem:[%s4 + $0xc0] sm:$0xff]
      %v736 = vld [vmem:[%s4 + $0xc8] sm:$0xff]
      %v737 = vld [vmem:[%s4 + $0xd0] sm:$0xff]
      %v738 = vld [vmem:[%s4 + $0xd8] sm:$0xff]
      %v739 = vld [vmem:[%s4 + $0xe0] sm:$0xff]
      %v740 = vld [vmem:[%s4 + $0xe8] sm:$0xff]
      %v741 = vld [vmem:[%s4 + $0xf0] sm:$0xff]
      %v742 = vld [vmem:[%s4 + $0xf8] sm:$0xff]
      %743 = vmatprep.subr.mxu0 0.0
      %744 = vmatpush1.msra.mxu0 %v711
      %745 = vmatprep.subr.mxu0 0.0
      %746 = vmatpush1.msra.mxu0 %v712
      %747 = vmatprep.subr.mxu0 0.0
      %748 = vmatpush1.msra.mxu0 %v713
      %749 = vmatprep.subr.mxu0 0.0
      %750 = vmatpush1.msra.mxu0 %v714
      %751 = vmatprep.subr.mxu0 0.0
      %752 = vmatpush1.msra.mxu0 %v715
      %753 = vmatprep.subr.mxu0 0.0
      %754 = vmatpush1.msra.mxu0 %v716
      %755 = vmatprep.subr.mxu0 0.0
      %756 = vmatpush1.msra.mxu0 %v717
      %757 = vmatprep.subr.mxu0 0.0
      %758 = vmatpush1.msra.mxu0 %v718
      %759 = vmatprep.subr.mxu0 0.0
      %760 = vmatpush1.msra.mxu0 %v719
      %761 = vmatprep.subr.mxu0 0.0
      %762 = vmatpush1.msra.mxu0 %v720
      %763 = vmatprep.subr.mxu0 0.0
      %764 = vmatpush1.msra.mxu0 %v721
      %765 = vmatprep.subr.mxu0 0.0
      %766 = vmatpush1.msra.mxu0 %v722
      %767 = vmatprep.subr.mxu0 0.0
      %768 = vmatpush1.msra.mxu0 %v723
      %769 = vmatprep.subr.mxu0 0.0
      %770 = vmatpush1.msra.mxu0 %v724
      %771 = vmatprep.subr.mxu0 0.0
      %772 = vmatpush1.msra.mxu0 %v725
      %773 = vmatprep.subr.mxu0 0.0
      %774 = vmatpush1.msra.mxu0 %v726
      %775 = vmatprep.subr.mxu0 0.0
      %776 = vmatpush1.msra.mxu0 %v727
      %777 = vmatprep.subr.mxu0 0.0
      %778 = vmatpush1.msra.mxu0 %v728
      %779 = vmatprep.subr.mxu0 0.0
      %780 = vmatpush1.msra.mxu0 %v729
      %781 = vmatprep.subr.mxu0 0.0
      %782 = vmatpush1.msra.mxu0 %v730
      %783 = vmatprep.subr.mxu0 0.0
      %784 = vmatpush1.msra.mxu0 %v731
      %785 = vmatprep.subr.mxu0 0.0
      %786 = vmatpush1.msra.mxu0 %v732
      %787 = vmatprep.subr.mxu0 0.0
      %788 = vmatpush1.msra.mxu0 %v733
      %789 = vmatprep.subr.mxu0 0.0
      %790 = vmatpush1.msra.mxu0 %v734
      %791 = vmatprep.subr.mxu0 0.0
      %792 = vmatpush1.msra.mxu0 %v735
      %793 = vmatprep.subr.mxu0 0.0
      %794 = vmatpush1.msra.mxu0 %v736
      %795 = vmatprep.subr.mxu0 0.0
      %796 = vmatpush1.msra.mxu0 %v737
      %797 = vmatprep.subr.mxu0 0.0
      %798 = vmatpush1.msra.mxu0 %v738
      %799 = vmatprep.subr.mxu0 0.0
      %800 = vmatpush1.msra.mxu0 %v739
      %801 = vmatprep.subr.mxu0 0.0
      %802 = vmatpush1.msra.mxu0 %v740
      %803 = vmatprep.subr.mxu0 0.0
      %804 = vmatpush1.msra.mxu0 %v741
      %805 = vmatprep.subr.mxu0 0.0
      %806 = vmatpush1.msra.mxu0 %v742
      %807 = vmatprep.mubr.f32.mxu0 %v680
      %808 = vmatmul.mubr.f32.gmra.mrb[0].mxu0 %v679
      %v809 = vpop.f32.mrb[0].mxu0
      %v810 = vadd.f32 0.0, %v809
      %v811 = vpop.f32.mrb[0].mxu0
      %812 = vmatprep.mubr.f32.mxu0 %v682
      %813 = vmatmul.mubr.f32.gmra.mrb[0].mxu0 %v681
      %v814 = vpop.f32.mrb[0].mxu0
      %v815 = vadd.f32 0.0, %v814
      %v816 = vpop.f32.mrb[0].mxu0
      %817 = vmatprep.mubr.f32.mxu0 %v684
      %818 = vmatmul.mubr.f32.gmra.mrb[0].mxu0 %v683
      %v819 = vpop.f32.mrb[0].mxu0
      %v820 = vadd.f32 0.0, %v819
      %v821 = vpop.f32.mrb[0].mxu0
      %822 = vmatprep.mubr.f32.mxu0 %v686
      %823 = vmatmul.mubr.f32.gmra.mrb[0].mxu0 %v685
      %v824 = vpop.f32.mrb[0].mxu0
      %v825 = vadd.f32 0.0, %v824
      %v826 = vpop.f32.mrb[0].mxu0
      %827 = vmatprep.mubr.f32.mxu0 %v688
      %828 = vmatmul.mubr.f32.gmra.mrb[0].mxu0 %v687
      %v829 = vpop.f32.mrb[0].mxu0
      %v830 = vadd.f32 0.0, %v829
      %v831 = vpop.f32.mrb[0].mxu0
      %832 = vmatprep.mubr.f32.mxu0 %v690
      %833 = vmatmul.mubr.f32.gmra.mrb[0].mxu0 %v689
      %v834 = vpop.f32.mrb[0].mxu0
      %v835 = vadd.f32 0.0, %v834
      %v836 = vpop.f32.mrb[0].mxu0
      %837 = vmatprep.mubr.f32.mxu0 %v692
      %838 = vmatmul.mubr.f32.gmra.mrb[0].mxu0 %v691
      %v839 = vpop.f32.mrb[0].mxu0
      %v840 = vadd.f32 0.0, %v839
      %v841 = vpop.f32.mrb[0].mxu0
      %842 = vmatprep.mubr.f32.mxu0 %v694
      %843 = vmatmul.mubr.f32.gmra.mrb[0].mxu0 %v693
      %v844 = vpop.f32.mrb[0].mxu0
      %v845 = vadd.f32 0.0, %v844
      %v846 = vpop.f32.mrb[0].mxu0
      %847 = vmatprep.mubr.f32.mxu0 %v696
      %848 = vmatmul.mubr.f32.gmra.mrb[0].mxu0 %v695
      %v849 = vpop.f32.mrb[0].mxu0
      %v850 = vadd.f32 0.0, %v849
      %v851 = vpop.f32.mrb[0].mxu0
      %852 = vmatprep.mubr.f32.mxu0 %v698
      %853 = vmatmul.mubr.f32.gmra.mrb[0].mxu0 %v697
      %v854 = vpop.f32.mrb[0].mxu0
      %v855 = vadd.f32 0.0, %v854
      %v856 = vpop.f32.mrb[0].mxu0
      %857 = vmatprep.mubr.f32.mxu0 %v700
      %858 = vmatmul.mubr.f32.gmra.mrb[0].mxu0 %v699
      %v859 = vpop.f32.mrb[0].mxu0
      %v860 = vadd.f32 0.0, %v859
      %v861 = vpop.f32.mrb[0].mxu0
      %862 = vmatprep.mubr.f32.mxu0 %v702
      %863 = vmatmul.mubr.f32.gmra.mrb[0].mxu0 %v701
      %v864 = vpop.f32.mrb[0].mxu0
      %v865 = vadd.f32 0.0, %v864
      %v866 = vpop.f32.mrb[0].mxu0
      %867 = vmatprep.mubr.f32.mxu0 %v704
      %868 = vmatmul.mubr.f32.gmra.mrb[0].mxu0 %v703
      %v869 = vpop.f32.mrb[0].mxu0
      %v870 = vadd.f32 0.0, %v869
      %v871 = vpop.f32.mrb[0].mxu0
      %872 = vmatprep.mubr.f32.mxu0 %v706
      %873 = vmatmul.mubr.f32.gmra.mrb[0].mxu0 %v705
      %v874 = vpop.f32.mrb[0].mxu0
      %v875 = vadd.f32 0.0, %v874
      %v876 = vpop.f32.mrb[0].mxu0
      %877 = vmatprep.mubr.f32.mxu0 %v708
      %878 = vmatmul.mubr.f32.gmra.mrb[0].mxu0 %v707
      %v879 = vpop.f32.mrb[0].mxu0
      %v880 = vadd.f32 0.0, %v879
      %v881 = vpop.f32.mrb[0].mxu0
      %882 = vmatprep.mubr.f32.mxu0 %v710
      %883 = vmatmul.mubr.f32.gmra.mrb[0].mxu0 %v709
      %v884 = vpop.f32.mrb[0].mxu0
      %v885 = vadd.f32 0.0, %v884
      %v886 = vpop.f32.mrb[0].mxu0
      %887 = vdwg.mxu0
      %vm888 = vcmask 64512
      %889 = vst.msk [vmem:[%s314] sm:$0xff] %vm888, %v810
      %890 = vst.msk [vmem:[%s314 + $0x8] sm:$0xff] %vm888, %v815
      %891 = vst.msk [vmem:[%s314 + $0x10] sm:$0xff] %vm888, %v820
      %892 = vst.msk [vmem:[%s314 + $0x18] sm:$0xff] %vm888, %v825
      %893 = vst.msk [vmem:[%s314 + $0x20] sm:$0xff] %vm888, %v830
      %894 = vst.msk [vmem:[%s314 + $0x28] sm:$0xff] %vm888, %v835
      %895 = vst.msk [vmem:[%s314 + $0x30] sm:$0xff] %vm888, %v840
      %896 = vst.msk [vmem:[%s314 + $0x38] sm:$0xff] %vm888, %v845
      %897 = vst.msk [vmem:[%s314 + $0x40] sm:$0xff] %vm888, %v850
      %898 = vst.msk [vmem:[%s314 + $0x48] sm:$0xff] %vm888, %v855
      %899 = vst.msk [vmem:[%s314 + $0x50] sm:$0xff] %vm888, %v860
      %900 = vst.msk [vmem:[%s314 + $0x58] sm:$0xff] %vm888, %v865
      %901 = vst.msk [vmem:[%s314 + $0x60] sm:$0xff] %vm888, %v870
      %902 = vst.msk [vmem:[%s314 + $0x68] sm:$0xff] %vm888, %v875
      %903 = vst.msk [vmem:[%s314 + $0x70] sm:$0xff] %vm888, %v880
      %904 = vst.msk [vmem:[%s314 + $0x78] sm:$0xff] %vm888, %v885
      %s905 = smul.u32 16, %s18
      %p906 = scmp.lt.s32.totalorder %s905, 127
      %s907 = scalar_select %p906, %s905, 127
      %s908 = smul.addr %s907, 8
      %s909 = scalar_lea.vmem %s5, %s908
      %s910 = smul.u32 16, %s18
      %p911 = scmp.lt.s32.totalorder %s910, 127
      %s912 = scalar_select %p911, %s910, 127
      %s913 = smul.addr %s912, 8
      %s914 = scalar_lea.vmem %s6, %s913
      // Predicated region
      $region41: #{tpu_custom_call.1} parent=39 // pred_check
        %p915 = pneg %p156
      $region42: #{tpu_custom_call.1} parent=39 // pred_check_branch
        %917 = sbr.rel (%p915) target = $region44
      $region43: #{tpu_custom_call.1} parent=39 // pred_region
        %s918 = smul.u32 16, %s18
      $region44: #{tpu_custom_call.1} parent=39 // pred_fallthru
        _
      // Predicated region
      $region45: #{tpu_custom_call.1} parent=39 // pred_check
        %p919 = pneg %p182
      $region46: #{tpu_custom_call.1} parent=39 // pred_check_branch
        %921 = sbr.rel (%p919) target = $region48
      $region47: #{tpu_custom_call.1} parent=39 // pred_region
        %s922 = smul.u32 16, %s18
      $region48: #{tpu_custom_call.1} parent=39 // pred_fallthru
        _
    $region40: #{tpu_custom_call.1} parent=5 // pred_fallthru
      _
    %p923 = scmp.le.s32.totalorder 2, %s13
    // Predicated region
    $region49: #{tpu_custom_call.1} parent=5 // pred_check
      %p924 = pneg %p923
    $region50: #{tpu_custom_call.1} parent=5 // pred_check_branch
      %926 = sbr.rel (%p924) target = $region52
    $region51: #{tpu_custom_call.1} parent=5 // pred_region
      %s927 = ssub.s32 %s13, 2
      // Predicated region
      $region53: #{tpu_custom_call.1} parent=51 // pred_check
        %p928 = pneg %p162
      $region54: #{tpu_custom_call.1} parent=51 // pred_check_branch
        %930 = sbr.rel (%p928) target = $region56
      $region55: #{tpu_custom_call.1} parent=51 // pred_region
        %s931 = smul.u32 16, %s19
        %p932 = scmp.lt.s32.totalorder %s931, 127
        %s933 = scalar_select %p932, %s931, 127
        %s934 = smul.addr %s933, 8
        %s935 = scalar_lea.vmem %s5, %s934
      $region56: #{tpu_custom_call.1} parent=51 // pred_fallthru
        _
      // Predicated region
      $region57: #{tpu_custom_call.1} parent=51 // pred_check
        %p936 = pneg %p188
      $region58: #{tpu_custom_call.1} parent=51 // pred_check_branch
        %938 = sbr.rel (%p936) target = $region60
      $region59: #{tpu_custom_call.1} parent=51 // pred_region
        %s939 = smul.u32 16, %s19
        %p940 = scmp.lt.s32.totalorder %s939, 127
        %s941 = scalar_select %p940, %s939, 127
        %s942 = smul.addr %s941, 8
        %s943 = scalar_lea.vmem %s6, %s942
      $region60: #{tpu_custom_call.1} parent=51 // pred_fallthru
        _
    $region52: #{tpu_custom_call.1} parent=5 // pred_fallthru
      _
  $region6: #{tpu_custom_call.1} parent=0 // loop_footer
    %s17 = sadd.s32 1, %s13
  $region7: #{tpu_custom_call.1} parent=0 // loop_footer_branch
    %12 = sbr.rel target = $region3
  $region8: #{tpu_custom_call.1} parent=0 // loop_exit
    _

</llo_original>
